<compile_context>
chip_gen: v7x
topology: tpu7x:2x2x1
jax: 0.10.0
libtpu: 0.0.40
codegen_flags: <defaults>
</compile_context>

<pallas_src>
import jax
import jax.numpy as jnp
from jax.experimental import pallas as pl
from jax.experimental.pallas import tpu as pltpu


def _round_up(x, m):
    return ((x + m - 1) // m) * m


def _vmem_budget_bytes():
    """Usable VMEM budget in bytes, derived from the actual chip."""
    cap = 64 * 1024 * 1024  # conservative default (v7x per-TensorCore)
    try:
        cap = int(pltpu.get_tpu_info().vmem_capacity_bytes)
    except Exception:
        pass
    # Leave headroom for Mosaic-internal scratch / semaphores.
    return max(int(cap * 3 // 4), 16 * 1024 * 1024)


# ---------------------------------------------------------------------------
# Kernels
# ---------------------------------------------------------------------------
def _linear_kernel_no_k(x_ref, w_ref, b_ref, o_ref):
    """Single-K-step tile: o = x @ w + b.  No accumulator, no init pass."""
    acc = jnp.dot(x_ref[...], w_ref[...], preferred_element_type=jnp.float32)
    o_ref[...] = (acc + b_ref[...].astype(jnp.float32)).astype(o_ref.dtype)


def _linear_kernel_k_tiled(x_ref, w_ref, b_ref, o_ref, acc_ref):
    """K-tiled tile: accumulate partial products over the K grid axis."""
    k = pl.program_id(2)
    part = jnp.dot(x_ref[...], w_ref[...], preferred_element_type=jnp.float32)

    @pl.when(k == 0)
    def _():
        acc_ref[...] = part            # direct write: saves the zero-init pass

    @pl.when(k > 0)
    def _():
        acc_ref[...] += part

    @pl.when(k == pl.num_programs(2) - 1)
    def _():
        o_ref[...] = (acc_ref[...] + b_ref[...].astype(jnp.float32)).astype(
            o_ref.dtype)


# ---------------------------------------------------------------------------
# Wrapper
# ---------------------------------------------------------------------------
@jax.jit
def graph_convolution(x, weight, bias):
    """y = x @ weight.T + bias  (exact nn.Linear semantics on the last dim).

    x:      [..., in_features]
    weight: [out_features, in_features]   (PyTorch convention)
    bias:   [out_features]
    """
    *lead, in_f = x.shape
    out_f = weight.shape[0]
    M = 1
    for d in lead:
        M *= d

    dtype = x.dtype
    isz = jnp.dtype(dtype).itemsize
    sub = {1: 32, 2: 16, 4: 8}.get(isz, 8)       # dtype-aware sublane minimum
    budget = _vmem_budget_bytes()

    # One-time layout change for the (small) weight: [N, K] -> [K, N], padded
    # to a lane-dense N.  (If weights are reused across many calls, this is
    # best hoisted to parameter-init time; it is a tiny transpose regardless.)
    K = in_f
    Np = _round_up(out_f, 128)
    w_kn = weight.astype(dtype).T                 # [K, out_f]
    b_2d = bias.astype(dtype).reshape(1, out_f)
    if Np != out_f:
        w_kn = jnp.pad(w_kn, ((0, 0), (0, Np - out_f)))
        b_2d = jnp.pad(b_2d, ((0, 0), (0, Np - out_f)))

    x2d = x.reshape(M, in_f)                      # M axis stays unpadded

    TN = min(Np, 512)
    n_cols = pl.cdiv(Np, TN)

    def vmem_need(tm, tk, tn, with_acc):
        need = (2 * tm * tk * isz       # x tiles (double buffered)
                + 2 * tk * tn * isz     # W tiles
                + 2 * 8 * tn * isz      # bias tiles (sublane-padded)
                + 2 * tm * tn * isz)    # out tiles
        if with_acc:
            need += tm * tn * 4         # f32 accumulator scratch
        return need

    def pick_tm(tk, tn, with_acc, cap):
        tm = min(cap, _round_up(M, sub))
        while tm > sub and vmem_need(tm, tk, tn, with_acc) > budget:
            tm = max(sub, _round_up(tm // 2, sub))
        return tm

    # Small padded N -> half-wide MXU; use taller row tiles to compensate.
    tm_cap = 1024 if Np <= 256 else 512

    single_k = vmem_need(sub, K, TN, with_acc=False) <= budget

    if single_k:
        # ---- fast path: no K grid axis, weight fully resident in VMEM ----
        TM = pick_tm(K, TN, with_acc=False, cap=tm_cap)
        n_rows = pl.cdiv(M, TM)
        # Give megacore (v7x: 2 TCs) at least 2 parallel blocks when worth it.
        if n_rows * n_cols == 1 and M >= 32 * sub:
            TM = _round_up(pl.cdiv(M, 2), sub)
            n_rows = pl.cdiv(M, TM)
        grid = (n_rows, n_cols)

        w_reads = 1 if n_cols == 1 else n_rows
        cost = pl.CostEstimate(
            flops=2 * M * K * Np,
            transcendentals=0,
            bytes_accessed=isz * (M * K + w_reads * K * Np + M * Np + Np),
        )

        out2d = pl.pallas_call(
            _linear_kernel_no_k,
            out_shape=jax.ShapeDtypeStruct((M, Np), dtype),
            grid_spec=pltpu.PrefetchScalarGridSpec(
                num_scalar_prefetch=0,
                grid=grid,
                in_specs=[
                    pl.BlockSpec((TM, K), lambda i, j: (i, 0)),   # x tile
                    pl.BlockSpec((K, TN), lambda i, j: (0, j)),   # W [K, N]
                    pl.BlockSpec((1, TN), lambda i, j: (0, j)),   # bias
                ],
                out_specs=pl.BlockSpec((TM, TN), lambda i, j: (i, j)),
            ),
            compiler_params=pltpu.CompilerParams(
                dimension_semantics=("parallel", "parallel"),
                vmem_limit_bytes=budget,
            ),
            cost_estimate=cost,
        )(x2d, w_kn, b_2d)
    else:
        # ---- general path: K too large to keep resident -> tile the K axis
        TK = min(512, _round_up(K, 128))
        Kp = _round_up(K, TK)
        if Kp != K:                    # K must be zero-padded for exactness
            x2d = jnp.pad(x2d, ((0, 0), (0, Kp - K)))
            w_kn = jnp.pad(w_kn, ((0, Kp - K), (0, 0)))
        TM = pick_tm(TK, TN, with_acc=True, cap=tm_cap)
        n_rows = pl.cdiv(M, TM)
        grid = (n_rows, n_cols, Kp // TK)

        cost = pl.CostEstimate(
            flops=2 * M * Kp * Np,
            transcendentals=0,
            bytes_accessed=isz * (n_cols * M * Kp + n_rows * Kp * Np
                                  + M * Np + Np),
        )

        out2d = pl.pallas_call(
            _linear_kernel_k_tiled,
            out_shape=jax.ShapeDtypeStruct((M, Np), dtype),
            grid_spec=pltpu.PrefetchScalarGridSpec(
                num_scalar_prefetch=0,
                grid=grid,
                in_specs=[
                    pl.BlockSpec((TM, TK), lambda i, j, k: (i, k)),   # x
                    pl.BlockSpec((TK, TN), lambda i, j, k: (k, j)),   # W [K,N]
                    pl.BlockSpec((1, TN), lambda i, j, k: (0, j)),    # bias
                ],
                out_specs=pl.BlockSpec((TM, TN), lambda i, j, k: (i, j)),
                scratch_shapes=[pltpu.VMEM((TM, TN), jnp.float32)],
            ),
            compiler_params=pltpu.CompilerParams(
                dimension_semantics=("parallel", "parallel", "arbitrary"),
                vmem_limit_bytes=budget,
            ),
            cost_estimate=cost,
        )(x2d, w_kn, b_2d)

    if Np != out_f:
        out2d = out2d[:, :out_f]
    return out2d.reshape(*lead, out_f)


def init_linear_params(key, in_features, out_features, dtype=jnp.float32):
    # Deterministic init mirroring nn.Linear's default: U(-1/sqrt(in), 1/sqrt(in)).
    kw, kb = jax.random.split(key)
    bound = 1.0 / jnp.sqrt(jnp.asarray(in_features, dtype))
    weight = jax.random.uniform(kw, (out_features, in_features), dtype,
                                minval=-bound, maxval=bound)
    bias = jax.random.uniform(kb, (out_features,), dtype,
                              minval=-bound, maxval=bound)
    return weight, bias


if __name__ == "__main__":
    key = jax.random.PRNGKey(0)
    k_x, k_p = jax.random.split(key)

    batch, n_nodes, in_features, out_features = 2, 8, 32, 16
    x = jax.random.normal(k_x, (batch, n_nodes, in_features), jnp.float32)
    weight, bias = init_linear_params(k_p, in_features, out_features)

    out = jax.block_until_ready(graph_convolution(x, weight, bias))

    # Sanity check against plain-JAX reference (nn.Linear semantics).
    ref = x @ weight.T + bias
    assert out.shape == (batch, n_nodes, out_features)
    assert jnp.allclose(out, ref, atol=1e-5, rtol=1e-5)

    print("KERNEL_OK")
</pallas_src>

<mosaic_0001>
module attributes {stable_mosaic.version = 11 : i64} {
  func.func @_linear_kernel_no_k(%arg0: i32, %arg1: i32, %arg2: memref<16x32xf32, #tpu.memory_space<vmem>>, %arg3: memref<32x128xf32, #tpu.memory_space<vmem>>, %arg4: memref<1x128xf32, #tpu.memory_space<vmem>>, %arg5: memref<16x128xf32, #tpu.memory_space<vmem>>) attributes {dimension_semantics = [#tpu.dimension_semantics<parallel>, #tpu.dimension_semantics<parallel>], iteration_bounds = array<i64: 1, 1>, scalar_prefetch = 0 : i64, scratch_operands = 0 : i64, tpu.core_type = #tpu.core_type<tc>, window_params = [{transform_indices = @transform_0, window_bounds = array<i64: 16, 32>}, {transform_indices = @transform_1, window_bounds = array<i64: 32, 128>}, {transform_indices = @transform_2, window_bounds = array<i64: 1, 128>}, {transform_indices = @transform_3, window_bounds = array<i64: 16, 128>}]} {
    %c0 = arith.constant 0 : index
    %c0_0 = arith.constant 0 : index
    %0 = vector.load %arg2[%c0, %c0_0] : memref<16x32xf32, #tpu.memory_space<vmem>>, vector<16x32xf32>
    %c0_1 = arith.constant 0 : index
    %c0_2 = arith.constant 0 : index
    %1 = vector.load %arg3[%c0_1, %c0_2] : memref<32x128xf32, #tpu.memory_space<vmem>>, vector<32x128xf32>
    %cst = arith.constant dense<0.000000e+00> : vector<16x128xf32>
    %2 = tpu.matmul %0, %1, %cst {dimension_numbers = #tpu.dot_dimension_numbers<[1], [0], [0], [1], [0, 0, 1, 1], [], []>} : vector<16x32xf32>, vector<32x128xf32>, vector<16x128xf32> -> vector<16x128xf32>
    %c0_3 = arith.constant 0 : index
    %c0_4 = arith.constant 0 : index
    %3 = vector.load %arg4[%c0_3, %c0_4] : memref<1x128xf32, #tpu.memory_space<vmem>>, vector<1x128xf32>
    %4 = vector.broadcast %3 : vector<1x128xf32> to vector<16x128xf32>
    %5 = arith.addf %2, %4 : vector<16x128xf32>
    %c0_5 = arith.constant 0 : index
    %c0_6 = arith.constant 0 : index
    %6 = vector.load %arg5[%c0_5, %c0_6] : memref<16x128xf32, #tpu.memory_space<vmem>>, vector<16x128xf32>
    tpu.vector_store %arg5[%c0_5, %c0_6], %5 {strides = array<i32>} : memref<16x128xf32, #tpu.memory_space<vmem>>, vector<16x128xf32>,
    return
  }
  func.func @transform_0(%arg0: i32, %arg1: i32) -> (i32, i32) {
    %c0_i32 = arith.constant 0 : i32
    %c0_i32_0 = arith.constant 0 : i32
    return %arg0, %c0_i32 : i32, i32
  }
  func.func @transform_1(%arg0: i32, %arg1: i32) -> (i32, i32) {
    %c0_i32 = arith.constant 0 : i32
    %c0_i32_0 = arith.constant 0 : i32
    return %c0_i32, %arg1 : i32, i32
  }
  func.func @transform_2(%arg0: i32, %arg1: i32) -> (i32, i32) {
    %c0_i32 = arith.constant 0 : i32
    %c0_i32_0 = arith.constant 0 : i32
    return %c0_i32, %arg1 : i32, i32
  }
  func.func @transform_3(%arg0: i32, %arg1: i32) -> (i32, i32) {
    %c0_i32 = arith.constant 0 : i32
    return %arg0, %arg1 : i32, i32
  }
}

</mosaic_0001>

<llo_original>
// kernel: graph_convolution.1
$region0: #{graph_convolution.1}
  #allocation0 [shape = 'u32[]', space=smem, size = 0x4, offset = 0x4, fixed_abs, tag = 'smem constant byte address 0x4 - core index']
  #allocation1 [shape = 'u32[144,128]{1,0:T(1,128)}', space=vmem, size = 0x12000, scoped, tag = 'internal scratch']
  %s0 = inlined_call_operand.vmem [shape: f32[16,32], index: 0, kind: input, shape index: {}]
  %s1 = inlined_call_operand.vmem [shape: f32[32,128], index: 1, kind: input, shape index: {}]
  %s2 = inlined_call_operand.vmem [shape: f32[1,128], index: 2, kind: input, shape index: {}]
  %s3 = inlined_call_operand.vmem [shape: f32[16,128], index: 3, kind: output, shape index: {}]
  %s4 = sld [smem:[#allocation0]]
  $region22: #{graph_convolution.1} parent=0
    _
  %s6 = ssub.s32 1, %s4
  %s7 = scalar_select 0, %s6, %s4
  // Predicated region
  $region2: #{graph_convolution.1} parent=0 // pred_check
    _
  $region3: #{graph_convolution.1} parent=0 // pred_check_branch
    %9 = sbr.rel (0) target = $region5
  $region4: #{graph_convolution.1} parent=0 // pred_region
    _
  $region5: #{graph_convolution.1} parent=0 // pred_fallthru
    _
  // Predicated region
  $region6: #{graph_convolution.1} parent=0 // pred_check
    _
  $region7: #{graph_convolution.1} parent=0 // pred_check_branch
    %11 = sbr.rel (0) target = $region9
  $region8: #{graph_convolution.1} parent=0 // pred_region
    _
  $region9: #{graph_convolution.1} parent=0 // pred_fallthru
    _
  // Predicated region
  $region10: #{graph_convolution.1} parent=0 // pred_check
    _
  $region11: #{graph_convolution.1} parent=0 // pred_check_branch
    %13 = sbr.rel (0) target = $region13
  $region12: #{graph_convolution.1} parent=0 // pred_region
    _
  $region13: #{graph_convolution.1} parent=0 // pred_fallthru
    _
  %v14 = vld [vmem:[%s0] sm:$0xff]
  %v15 = vld [vmem:[%s0 + $0x8] sm:$0xff]
  %v16 = vld [vmem:[%s1] sm:$0xff]
  %v17 = vld [vmem:[%s1 + $0x8] sm:$0xff]
  %v18 = vld [vmem:[%s1 + $0x10] sm:$0xff]
  %v19 = vld [vmem:[%s1 + $0x18] sm:$0xff]
  %v20 = vld [vmem:[%s2] sm:$0x1]
  %v22 = vlaneseq
  %v23 = vshrl.u32 %v22, 7
  %v24 = vsub.s32 0, %v23
  %v25 = vrot.slane %v20, %v24
  %vm27 = vcmask 261120
  %v29 = vsel %vm27, %v14, 0
  %v32 = vsel %vm27, %v15, 0
  %34 = vmatprep.subr.mxu0 0.0
  %35 = vmatpush1.msra.mxu0 %v16
  %36 = vmatprep.subr.mxu0 0.0
  %37 = vmatpush1.msra.mxu0 %v17
  %38 = vmatprep.subr.mxu0 0.0
  %39 = vmatpush1.msra.mxu0 %v18
  %40 = vmatprep.subr.mxu0 0.0
  %41 = vmatpush1.msra.mxu0 %v19
  %42 = vmatprep.subr.mxu0 0.0
  %43 = vmatpush1.msra.mxu0 0.0
  %44 = vmatprep.subr.mxu0 0.0
  %45 = vmatpush1.msra.mxu0 0.0
  %46 = vmatprep.subr.mxu0 0.0
  %47 = vmatpush1.msra.mxu0 0.0
  %48 = vmatprep.subr.mxu0 0.0
  %49 = vmatpush1.msra.mxu0 0.0
  %50 = vmatprep.subr.mxu0 0.0
  %51 = vmatpush1.msra.mxu0 0.0
  %52 = vmatprep.subr.mxu0 0.0
  %53 = vmatpush1.msra.mxu0 0.0
  %54 = vmatprep.subr.mxu0 0.0
  %55 = vmatpush1.msra.mxu0 0.0
  %56 = vmatprep.subr.mxu0 0.0
  %57 = vmatpush1.msra.mxu0 0.0
  %58 = vmatprep.subr.mxu0 0.0
  %59 = vmatpush1.msra.mxu0 0.0
  %60 = vmatprep.subr.mxu0 0.0
  %61 = vmatpush1.msra.mxu0 0.0
  %62 = vmatprep.subr.mxu0 0.0
  %63 = vmatpush1.msra.mxu0 0.0
  %64 = vmatprep.subr.mxu0 0.0
  %65 = vmatpush1.msra.mxu0 0.0
  %66 = vmatprep.subr.mxu0 0.0
  %67 = vmatpush1.msra.mxu0 0.0
  %68 = vmatprep.subr.mxu0 0.0
  %69 = vmatpush1.msra.mxu0 0.0
  %70 = vmatprep.subr.mxu0 0.0
  %71 = vmatpush1.msra.mxu0 0.0
  %72 = vmatprep.subr.mxu0 0.0
  %73 = vmatpush1.msra.mxu0 0.0
  %74 = vmatprep.subr.mxu0 0.0
  %75 = vmatpush1.msra.mxu0 0.0
  %76 = vmatprep.subr.mxu0 0.0
  %77 = vmatpush1.msra.mxu0 0.0
  %78 = vmatprep.subr.mxu0 0.0
  %79 = vmatpush1.msra.mxu0 0.0
  %80 = vmatprep.subr.mxu0 0.0
  %81 = vmatpush1.msra.mxu0 0.0
  %82 = vmatprep.subr.mxu0 0.0
  %83 = vmatpush1.msra.mxu0 0.0
  %84 = vmatprep.subr.mxu0 0.0
  %85 = vmatpush1.msra.mxu0 0.0
  %86 = vmatprep.subr.mxu0 0.0
  %87 = vmatpush1.msra.mxu0 0.0
  %88 = vmatprep.subr.mxu0 0.0
  %89 = vmatpush1.msra.mxu0 0.0
  %90 = vmatprep.subr.mxu0 0.0
  %91 = vmatpush1.msra.mxu0 0.0
  %92 = vmatprep.subr.mxu0 0.0
  %93 = vmatpush1.msra.mxu0 0.0
  %94 = vmatprep.subr.mxu0 0.0
  %95 = vmatpush1.msra.mxu0 0.0
  %96 = vmatprep.subr.mxu0 0.0
  %97 = vmatpush1.msra.mxu0 0.0
  %98 = vmatprep.mubr.f32.mxu0 0.0
  %99 = vmatmul.mubr.f32.gmra.mrb[0].mxu0 %v29
  %v100 = vpop.f32.mrb[0].mxu0
  %v101 = vadd.f32 %v25, %v100
  %v102 = vpop.f32.mrb[0].mxu0
  %103 = vmatprep.mubr.f32.mxu0 0.0
  %104 = vmatmul.mubr.f32.gmra.mrb[0].mxu0 %v32
  %v105 = vpop.f32.mrb[0].mxu0
  %v106 = vadd.f32 %v25, %v105
  %v107 = vpop.f32.mrb[0].mxu0
  %108 = vdwg.mxu0
  %109 = vst [vmem:[%s3] sm:$0xff] %v101
  %110 = vst [vmem:[%s3 + $0x8] sm:$0xff] %v106
  // Predicated region
  $region14: #{graph_convolution.1} parent=0 // pred_check
    _
  $region15: #{graph_convolution.1} parent=0 // pred_check_branch
    %112 = sbr.rel (0) target = $region17
  $region16: #{graph_convolution.1} parent=0 // pred_region
    _
  $region17: #{graph_convolution.1} parent=0 // pred_fallthru
    _
  // Predicated region
  $region18: #{graph_convolution.1} parent=0 // pred_check
    _
  $region19: #{graph_convolution.1} parent=0 // pred_check_branch
    %114 = sbr.rel (0) target = $region21
  $region20: #{graph_convolution.1} parent=0 // pred_region
    _
  $region21: #{graph_convolution.1} parent=0 // pred_fallthru
    _

</llo_original>
